<compile_context>
chip_gen: v7x
topology: tpu7x:2x2x1
jax: 0.10.0
libtpu: 0.0.40
codegen_flags: <defaults>
</compile_context>

<pallas_src>
import functools

import jax
import jax.numpy as jnp
from jax.experimental import pallas as pl
from jax.experimental.pallas import tpu as pltpu


def _round_up(x, m):
    return ((x + m - 1) // m) * m


def _round_down(x, m):
    return (x // m) * m


def _stable_softplus(x):
    # Numerically stable softplus: max(x, 0) + log1p(exp(-|x|))
    return jnp.maximum(x, 0.0) + jnp.log1p(jnp.exp(-jnp.abs(x)))


def _combiner_kernel(z_ref, h_ref, w1_ref, b1_ref, w23_ref, b23_ref,
                     out_ref, *, z_dim, compute_dtype):
    # --- z_to_hidden linear + tanh (f32 epilogue) ---
    z = z_ref[...].astype(compute_dtype)
    w1 = w1_ref[...].astype(compute_dtype)
    pre_h = jnp.dot(z, w1, preferred_element_type=jnp.float32) + b1_ref[...]
    h_combined = 0.5 * (jnp.tanh(pre_h) + h_ref[...])

    # --- fused hidden_to_loc / hidden_to_scale: one matmul, lane-dense out ---
    out = jnp.dot(h_combined.astype(compute_dtype),
                  w23_ref[...].astype(compute_dtype),
                  preferred_element_type=jnp.float32) + b23_ref[...]

    # Apply softplus only to the scale half via a lane mask (loc lanes are
    # [0, z_dim); scale lanes are [z_dim, 2*z_dim); extra lanes are padding
    # and get sliced off in the wrapper, so their value is irrelevant).
    col = jax.lax.broadcasted_iota(jnp.int32, out.shape, 1)
    out_ref[...] = jnp.where(col >= z_dim,
                             _stable_softplus(out),
                             out).astype(out_ref.dtype)


def pack_combiner_params(params):
    """Pack W2/W3 and b2/b3 into a single fused projection, zero-padded to a
    lane-dense (multiple-of-128) output width.  Do this once per model."""
    w23 = jnp.concatenate([params["w2"], params["w3"]], axis=1)
    b23 = jnp.concatenate([params["b2"], params["b3"]], axis=1)
    out_dim = w23.shape[1]
    out_pad = max(_round_up(out_dim, 128), 128)
    if out_pad != out_dim:
        w23 = jnp.pad(w23, ((0, 0), (0, out_pad - out_dim)))
        b23 = jnp.pad(b23, ((0, 0), (0, out_pad - out_dim)))
    return {
        "w1": params["w1"],
        "b1": params["b1"],
        "w23": w23,
        "b23": b23,
    }


def _pick_tile_b(B, z_dim, rnn_dim, out_pad):
    """Batch tile: multiple of 8, capped at 512, sized so the double-buffered
    activation tiles + resident weights fit a conservative VMEM budget (safe on
    v7x's 64 MiB physical / 32 MiB scoped-default VMEM even for big rnn_dim)."""
    budget = 24 * 1024 * 1024
    # Weights / biases (assume double-buffered to be conservative).
    weight_bytes = 8 * (z_dim * rnn_dim + rnn_dim + rnn_dim * out_pad + out_pad)
    # Per batch-row activation footprint (z, h, out), double-buffered.
    per_row = 8 * (z_dim + rnn_dim + out_pad)
    avail = max(budget - weight_bytes, per_row * 8)
    tile_b = _round_down(avail // per_row, 8)
    return int(max(8, min(512, tile_b, _round_up(B, 8))))


def combiner_forward(z_t_1, h_rnn, packed_params, *, compute_dtype=jnp.float32):
    """Combiner forward pass as a single batch-tiled Pallas kernel.

    z_t_1:          (B, z_dim)   float32
    h_rnn:          (B, rnn_dim) float32
    packed_params:  dict with w1 (z_dim, rnn_dim), b1 (1, rnn_dim),
                    w23 (rnn_dim, out_pad), b23 (1, out_pad)  [out_pad >= 2*z_dim]
    returns (loc, scale), each (B, z_dim) float32
    """
    B, z_dim = z_t_1.shape
    rnn_dim = h_rnn.shape[1]
    out_pad = packed_params["w23"].shape[1]

    tile_b = _pick_tile_b(B, z_dim, rnn_dim, out_pad)
    b_pad = _round_up(B, tile_b)
    if b_pad != B:
        pad = b_pad - B
        z_t_1 = jnp.pad(z_t_1, ((0, pad), (0, 0)))
        h_rnn = jnp.pad(h_rnn, ((0, pad), (0, 0)))
    grid = (b_pad // tile_b,)

    kernel = functools.partial(_combiner_kernel, z_dim=z_dim,
                               compute_dtype=compute_dtype)

    packed_out = pl.pallas_call(
        kernel,
        out_shape=jax.ShapeDtypeStruct((b_pad, out_pad), jnp.float32),
        grid_spec=pltpu.PrefetchScalarGridSpec(
            num_scalar_prefetch=0,
            grid=grid,
            in_specs=[
                pl.BlockSpec((tile_b, z_dim), lambda i: (i, 0)),     # z_t_1
                pl.BlockSpec((tile_b, rnn_dim), lambda i: (i, 0)),   # h_rnn
                pl.BlockSpec((z_dim, rnn_dim), lambda i: (0, 0)),    # w1 (resident)
                pl.BlockSpec((1, rnn_dim), lambda i: (0, 0)),        # b1 (resident)
                pl.BlockSpec((rnn_dim, out_pad), lambda i: (0, 0)),  # w23 (resident)
                pl.BlockSpec((1, out_pad), lambda i: (0, 0)),        # b23 (resident)
            ],
            out_specs=pl.BlockSpec((tile_b, out_pad), lambda i: (i, 0)),
        ),
        compiler_params=pltpu.CompilerParams(
            dimension_semantics=("parallel",),   # shards across TCs on v7x
        ),
    )(z_t_1, h_rnn,
      packed_params["w1"], packed_params["b1"],
      packed_params["w23"], packed_params["b23"])

    loc = packed_out[:B, :z_dim]
    scale = packed_out[:B, z_dim:2 * z_dim]
    return loc, scale


def init_combiner_params(key, z_dim, rnn_dim):
    """Deterministic synthetic parameters (same shapes as the nn.Linear layers,
    stored pre-transposed as (in_features, out_features))."""
    ks = jax.random.split(key, 6)
    scale1 = 1.0 / jnp.sqrt(z_dim)
    scale2 = 1.0 / jnp.sqrt(rnn_dim)
    return {
        # lin_z_to_hidden: Linear(z_dim, rnn_dim)
        "w1": jax.random.uniform(ks[0], (z_dim, rnn_dim), jnp.float32, -scale1, scale1),
        "b1": jax.random.uniform(ks[1], (1, rnn_dim), jnp.float32, -scale1, scale1),
        # lin_hidden_to_loc: Linear(rnn_dim, z_dim)
        "w2": jax.random.uniform(ks[2], (rnn_dim, z_dim), jnp.float32, -scale2, scale2),
        "b2": jax.random.uniform(ks[3], (1, z_dim), jnp.float32, -scale2, scale2),
        # lin_hidden_to_scale: Linear(rnn_dim, z_dim)
        "w3": jax.random.uniform(ks[4], (rnn_dim, z_dim), jnp.float32, -scale2, scale2),
        "b3": jax.random.uniform(ks[5], (1, z_dim), jnp.float32, -scale2, scale2),
    }


def combiner_reference(z_t_1, h_rnn, params):
    """Pure-JAX reference for correctness checking."""
    h_combined = 0.5 * (jnp.tanh(z_t_1 @ params["w1"] + params["b1"]) + h_rnn)
    loc = h_combined @ params["w2"] + params["b2"]
    scale = jax.nn.softplus(h_combined @ params["w3"] + params["b3"])
    return loc, scale


if __name__ == "__main__":
    B, z_dim, rnn_dim = 8, 32, 64

    key = jax.random.PRNGKey(0)
    k_z, k_h, k_p = jax.random.split(key, 3)

    z_t_1 = jax.random.normal(k_z, (B, z_dim), jnp.float32)
    h_rnn = jax.random.normal(k_h, (B, rnn_dim), jnp.float32)
    params = init_combiner_params(k_p, z_dim, rnn_dim)
    packed = pack_combiner_params(params)   # pack fused W2||W3, b2||b3 once

    loc, scale = combiner_forward(z_t_1, h_rnn, packed)
    jax.block_until_ready((loc, scale))

    loc_ref, scale_ref = combiner_reference(z_t_1, h_rnn, params)
    assert jnp.allclose(loc, loc_ref, atol=1e-5, rtol=1e-5)
    assert jnp.allclose(scale, scale_ref, atol=1e-5, rtol=1e-5)

    print("KERNEL_OK")
</pallas_src>

<mosaic_0001>
module attributes {stable_mosaic.version = 11 : i64} {
  func.func @_combiner_kernel(%arg0: i32, %arg1: memref<8x32xf32, #tpu.memory_space<vmem>>, %arg2: memref<8x64xf32, #tpu.memory_space<vmem>>, %arg3: memref<32x64xf32, #tpu.memory_space<vmem>>, %arg4: memref<1x64xf32, #tpu.memory_space<vmem>>, %arg5: memref<64x128xf32, #tpu.memory_space<vmem>>, %arg6: memref<1x128xf32, #tpu.memory_space<vmem>>, %arg7: memref<8x128xf32, #tpu.memory_space<vmem>>) attributes {dimension_semantics = [#tpu.dimension_semantics<parallel>], iteration_bounds = array<i64: 1>, scalar_prefetch = 0 : i64, scratch_operands = 0 : i64, tpu.core_type = #tpu.core_type<tc>, window_params = [{transform_indices = @transform_0, window_bounds = array<i64: 8, 32>}, {transform_indices = @transform_1, window_bounds = array<i64: 8, 64>}, {pipeline_mode = #tpu.pipeline_mode<synchronous>, transform_indices = @transform_2, window_bounds = array<i64: 32, 64>}, {pipeline_mode = #tpu.pipeline_mode<synchronous>, transform_indices = @transform_3, window_bounds = array<i64: 1, 64>}, {pipeline_mode = #tpu.pipeline_mode<synchronous>, transform_indices = @transform_4, window_bounds = array<i64: 64, 128>}, {pipeline_mode = #tpu.pipeline_mode<synchronous>, transform_indices = @transform_5, window_bounds = array<i64: 1, 128>}, {transform_indices = @transform_6, window_bounds = array<i64: 8, 128>}]} {
    %c0 = arith.constant 0 : index
    %c0_0 = arith.constant 0 : index
    %0 = vector.load %arg1[%c0, %c0_0] : memref<8x32xf32, #tpu.memory_space<vmem>>, vector<8x32xf32>
    %c0_1 = arith.constant 0 : index
    %c0_2 = arith.constant 0 : index
    %1 = vector.load %arg3[%c0_1, %c0_2] : memref<32x64xf32, #tpu.memory_space<vmem>>, vector<32x64xf32>
    %cst = arith.constant dense<0.000000e+00> : vector<8x64xf32>
    %2 = tpu.matmul %0, %1, %cst {dimension_numbers = #tpu.dot_dimension_numbers<[1], [0], [0], [1], [0, 0, 1, 1], [], []>} : vector<8x32xf32>, vector<32x64xf32>, vector<8x64xf32> -> vector<8x64xf32>
    %c0_3 = arith.constant 0 : index
    %c0_4 = arith.constant 0 : index
    %3 = vector.load %arg4[%c0_3, %c0_4] : memref<1x64xf32, #tpu.memory_space<vmem>>, vector<1x64xf32>
    %4 = vector.broadcast %3 : vector<1x64xf32> to vector<8x64xf32>
    %5 = arith.addf %2, %4 : vector<8x64xf32>
    %6 = math.tanh %5 : vector<8x64xf32>
    %c0_5 = arith.constant 0 : index
    %c0_6 = arith.constant 0 : index
    %7 = vector.load %arg2[%c0_5, %c0_6] : memref<8x64xf32, #tpu.memory_space<vmem>>, vector<8x64xf32>
    %8 = arith.addf %6, %7 : vector<8x64xf32>
    %cst_7 = arith.constant 5.000000e-01 : f32
    %9 = vector.broadcast %cst_7 : f32 to vector<8x64xf32>
    %10 = arith.mulf %9, %8 : vector<8x64xf32>
    %c0_8 = arith.constant 0 : index
    %c0_9 = arith.constant 0 : index
    %11 = vector.load %arg5[%c0_8, %c0_9] : memref<64x128xf32, #tpu.memory_space<vmem>>, vector<64x128xf32>
    %cst_10 = arith.constant dense<0.000000e+00> : vector<8x128xf32>
    %12 = tpu.matmul %10, %11, %cst_10 {dimension_numbers = #tpu.dot_dimension_numbers<[1], [0], [0], [1], [0, 0, 1, 1], [], []>} : vector<8x64xf32>, vector<64x128xf32>, vector<8x128xf32> -> vector<8x128xf32>
    %c0_11 = arith.constant 0 : index
    %c0_12 = arith.constant 0 : index
    %13 = vector.load %arg6[%c0_11, %c0_12] : memref<1x128xf32, #tpu.memory_space<vmem>>, vector<1x128xf32>
    %14 = vector.broadcast %13 : vector<1x128xf32> to vector<8x128xf32>
    %15 = arith.addf %12, %14 : vector<8x128xf32>
    %16 = tpu.iota {dimensions = array<i32: 1>} : vector<8x128xi32>
    %c32_i32 = arith.constant 32 : i32
    %17 = vector.broadcast %c32_i32 : i32 to vector<8x128xi32>
    %18 = arith.cmpi sge, %16, %17 : vector<8x128xi32>
    %cst_13 = arith.constant 0.000000e+00 : f32
    %19 = vector.broadcast %cst_13 : f32 to vector<8x128xf32>
    %20 = arith.maximumf %15, %19 : vector<8x128xf32>
    %21 = math.absf %15 : vector<8x128xf32>
    %cst_14 = arith.constant 0.000000e+00 : f32
    %22 = vector.broadcast %cst_14 : f32 to vector<8x128xf32>
    %23 = arith.subf %22, %21 : vector<8x128xf32>
    %24 = math.exp %23 : vector<8x128xf32>
    %25 = math.log1p %24 : vector<8x128xf32>
    %26 = arith.addf %20, %25 : vector<8x128xf32>
    %27 = arith.select %18, %26, %15 : vector<8x128xi1>, vector<8x128xf32>
    %c0_15 = arith.constant 0 : index
    %c0_16 = arith.constant 0 : index
    %28 = vector.load %arg7[%c0_15, %c0_16] : memref<8x128xf32, #tpu.memory_space<vmem>>, vector<8x128xf32>
    tpu.vector_store %arg7[%c0_15, %c0_16], %27 {strides = array<i32>} : memref<8x128xf32, #tpu.memory_space<vmem>>, vector<8x128xf32>,
    return
  }
  func.func @transform_0(%arg0: i32) -> (i32, i32) {
    %c0_i32 = arith.constant 0 : i32
    %c0_i32_0 = arith.constant 0 : i32
    return %arg0, %c0_i32 : i32, i32
  }
  func.func @transform_1(%arg0: i32) -> (i32, i32) {
    %c0_i32 = arith.constant 0 : i32
    %c0_i32_0 = arith.constant 0 : i32
    return %arg0, %c0_i32 : i32, i32
  }
  func.func @transform_2(%arg0: i32) -> (i32, i32) {
    %c0_i32 = arith.constant 0 : i32
    %c0_i32_0 = arith.constant 0 : i32
    %c0_i32_1 = arith.constant 0 : i32
    return %c0_i32, %c0_i32_0 : i32, i32
  }
  func.func @transform_3(%arg0: i32) -> (i32, i32) {
    %c0_i32 = arith.constant 0 : i32
    %c0_i32_0 = arith.constant 0 : i32
    %c0_i32_1 = arith.constant 0 : i32
    return %c0_i32, %c0_i32_0 : i32, i32
  }
  func.func @transform_4(%arg0: i32) -> (i32, i32) {
    %c0_i32 = arith.constant 0 : i32
    %c0_i32_0 = arith.constant 0 : i32
    %c0_i32_1 = arith.constant 0 : i32
    return %c0_i32, %c0_i32_0 : i32, i32
  }
  func.func @transform_5(%arg0: i32) -> (i32, i32) {
    %c0_i32 = arith.constant 0 : i32
    %c0_i32_0 = arith.constant 0 : i32
    %c0_i32_1 = arith.constant 0 : i32
    return %c0_i32, %c0_i32_0 : i32, i32
  }
  func.func @transform_6(%arg0: i32) -> (i32, i32) {
    %c0_i32 = arith.constant 0 : i32
    %c0_i32_0 = arith.constant 0 : i32
    return %arg0, %c0_i32 : i32, i32
  }
}

</mosaic_0001>

<llo_original>
// kernel: tpu_custom_call.1
$region0: #{tpu_custom_call.1}
  #allocation0 [shape = 'u32[]', space=smem, size = 0x4, offset = 0x4, fixed_abs, tag = 'smem constant byte address 0x4 - core index']
  #allocation1 [shape = 'u32[144,128]{1,0:T(1,128)}', space=vmem, size = 0x12000, scoped, tag = 'internal scratch']
  %s0 = inlined_call_operand.hbm [shape: f32[8,32], index: 0, kind: input, shape index: {}]
  %s1 = inlined_call_operand.hbm [shape: f32[8,64], index: 1, kind: input, shape index: {}]
  %s2 = inlined_call_operand.hbm [shape: f32[32,64], index: 2, kind: input, shape index: {}]
  %s3 = inlined_call_operand.vmem [shape: f32[1,64], index: 3, kind: input, shape index: {}]
  %s4 = inlined_call_operand.hbm [shape: f32[64,128], index: 4, kind: input, shape index: {}]
  %s5 = inlined_call_operand.vmem [shape: f32[1,128], index: 5, kind: input, shape index: {}]
  %s6 = inlined_call_operand.hbm [shape: f32[8,128], index: 6, kind: output, shape index: {}]
  %s7 = sld [smem:[#allocation0]]
  $region50: #{tpu_custom_call.1} parent=0
    _
  %s9 = ssub.s32 1, %s7
  %s10 = scalar_select 0, %s9, %s7
  $region1: #{tpu_custom_call.1} parent=0
    #allocation2 [shape = 'u8[4096]{0}', space=vmem, size = 0x1000, scoped, tag = 'input window, operand 0, single buffered']
    #allocation3 [shape = 's32[1]{0}', space=sflag, size = 0x4, scoped, tag = 'scoped memory for tpu_custom_call.1']
    #allocation4 [shape = 's32[1]{0}', space=sflag, size = 0x4, scoped, tag = 'scoped memory for tpu_custom_call.1']
    #allocation5 [shape = 'u8[4096]{0}', space=vmem, size = 0x1000, scoped, tag = 'input window, operand 1, single buffered']
    #allocation6 [shape = 's32[1]{0}', space=sflag, size = 0x4, scoped, tag = 'scoped memory for tpu_custom_call.1']
    #allocation7 [shape = 'u8[16384]{0}', space=vmem, size = 0x4000, scoped, tag = 'input window, operand 2, single buffered']
    #allocation8 [shape = 'u8[32768]{0}', space=vmem, size = 0x8000, scoped, tag = 'input window, operand 4, single buffered']
    #allocation9 [shape = 's32[1]{0}', space=sflag, size = 0x4, scoped, tag = 'scoped memory for tpu_custom_call.1']
    #allocation10 [shape = 'u8[4096]{0}', space=vmem, size = 0x1000, scoped, tag = 'output window, operand 0, single buffered']
    %11 = vsyncpa [#allocation3], 0
    %12 = vsyncpa [#allocation6], 0
    %13 = vsyncpa [#allocation9], 0
    %14 = vsyncpa [#allocation4], 0
    // Predicated region
    $region2: #{tpu_custom_call.1} parent=1 // pred_check
      _
    $region3: #{tpu_custom_call.1} parent=1 // pred_check_branch
      %16 = sbr.rel (0) target = $region5
    $region4: #{tpu_custom_call.1} parent=1 // pred_region
      %s18 = ssub.s32 128, 128
      %19 = vsyncadd [#allocation3], %s18
      %s21 = sshll.u32 [#allocation2], 4
      %s22 = int_to_ptr.vmem [resolvable:$true] %s21
      %24 = dma.hbm_to_vmem [thread:$0]  %s0, 128, %s22, [#allocation3]
    $region5: #{tpu_custom_call.1} parent=1 // pred_fallthru
      _
    // Predicated region
    $region6: #{tpu_custom_call.1} parent=1 // pred_check
      _
    $region7: #{tpu_custom_call.1} parent=1 // pred_check_branch
      %26 = sbr.rel (0) target = $region9
    $region8: #{tpu_custom_call.1} parent=1 // pred_region
      %s28 = ssub.s32 128, 128
      %29 = vsyncadd [#allocation6], %s28
      %s31 = sshll.u32 [#allocation5], 4
      %s32 = int_to_ptr.vmem [resolvable:$true] %s31
      %34 = dma.hbm_to_vmem [thread:$0]  %s1, 128, %s32, [#allocation6]
    $region9: #{tpu_custom_call.1} parent=1 // pred_fallthru
      _
    // Predicated region
    $region10: #{tpu_custom_call.1} parent=1 // pred_check
      _
    $region11: #{tpu_custom_call.1} parent=1 // pred_check_branch
      %36 = sbr.rel (0) target = $region13
    $region12: #{tpu_custom_call.1} parent=1 // pred_region
      %s38 = ssub.s32 512, 512
      %39 = vsyncadd [#allocation6], %s38
      %s40 = sshll.u32 [#allocation7], 4
      %s41 = int_to_ptr.vmem [resolvable:$true] %s40
      %46 = dma.hbm_to_vmem [thread:$0]  %s2, 512, %s41, [#allocation6], 128, 128, 8
    $region13: #{tpu_custom_call.1} parent=1 // pred_fallthru
      _
    // Predicated region
    $region14: #{tpu_custom_call.1} parent=1 // pred_check
      _
    $region15: #{tpu_custom_call.1} parent=1 // pred_check_branch
      %48 = sbr.rel (0) target = $region17
    $region16: #{tpu_custom_call.1} parent=1 // pred_region
      _
    $region17: #{tpu_custom_call.1} parent=1 // pred_fallthru
      _
    // Predicated region
    $region18: #{tpu_custom_call.1} parent=1 // pred_check
      _
    $region19: #{tpu_custom_call.1} parent=1 // pred_check_branch
      %50 = sbr.rel (0) target = $region21
    $region20: #{tpu_custom_call.1} parent=1 // pred_region
      %s52 = ssub.s32 1024, 1024
      %53 = vsyncadd [#allocation9], %s52
      %s54 = sshll.u32 [#allocation8], 4
      %s55 = int_to_ptr.vmem [resolvable:$true] %s54
      %60 = dma.hbm_to_vmem [thread:$0]  %s4, 1024, %s55, [#allocation9], 128, 128, 8
    $region21: #{tpu_custom_call.1} parent=1 // pred_fallthru
      _
    // Predicated region
    $region22: #{tpu_custom_call.1} parent=1 // pred_check
      _
    $region23: #{tpu_custom_call.1} parent=1 // pred_check_branch
      %62 = sbr.rel (0) target = $region25
    $region24: #{tpu_custom_call.1} parent=1 // pred_region
      _
    $region25: #{tpu_custom_call.1} parent=1 // pred_fallthru
      _
    // Predicated region
    $region26: #{tpu_custom_call.1} parent=1 // pred_check
      _
    $region27: #{tpu_custom_call.1} parent=1 // pred_check_branch
      %64 = sbr.rel (0) target = $region29
    $region28: #{tpu_custom_call.1} parent=1 // pred_region
      %65 = dma.done [#allocation3], 128
    $region29: #{tpu_custom_call.1} parent=1 // pred_fallthru
      _
    // Predicated region
    $region30: #{tpu_custom_call.1} parent=1 // pred_check
      _
    $region31: #{tpu_custom_call.1} parent=1 // pred_check_branch
      %67 = sbr.rel (0) target = $region33
    $region32: #{tpu_custom_call.1} parent=1 // pred_region
      %68 = dma.done [#allocation6], 128
    $region33: #{tpu_custom_call.1} parent=1 // pred_fallthru
      _
    // Predicated region
    $region34: #{tpu_custom_call.1} parent=1 // pred_check
      _
    $region35: #{tpu_custom_call.1} parent=1 // pred_check_branch
      %70 = sbr.rel (0) target = $region37
    $region36: #{tpu_custom_call.1} parent=1 // pred_region
      %71 = dma.done [#allocation6], 512
    $region37: #{tpu_custom_call.1} parent=1 // pred_fallthru
      _
    // Predicated region
    $region38: #{tpu_custom_call.1} parent=1 // pred_check
      _
    $region39: #{tpu_custom_call.1} parent=1 // pred_check_branch
      %73 = sbr.rel (0) target = $region41
    $region40: #{tpu_custom_call.1} parent=1 // pred_region
      %74 = dma.done [#allocation9], 1024
    $region41: #{tpu_custom_call.1} parent=1 // pred_fallthru
      _
    %v75 = vld [vmem:[#allocation2] sm:$0xff]
    %v76 = vld [vmem:[#allocation7] sm:$0xff]
    %v77 = vld [vmem:[#allocation7 + $0x8] sm:$0xff]
    %v78 = vld [vmem:[#allocation7 + $0x10] sm:$0xff]
    %v79 = vld [vmem:[#allocation7 + $0x18] sm:$0xff]
    %v80 = vld [vmem:[%s3] sm:$0x1]
    %v82 = vlaneseq
    %v83 = vshrl.u32 %v82, 7
    %v84 = vsub.s32 0, %v83
    %v85 = vrot.slane %v80, %v84
    %vm87 = vcmask 261120
    %v89 = vsel %vm87, %v75, 0
    %91 = vmatprep.subr.mxu0 0.0
    %92 = vmatpush1.msra.mxu0 %v76
    %93 = vmatprep.subr.mxu0 0.0
    %94 = vmatpush1.msra.mxu0 %v77
    %95 = vmatprep.subr.mxu0 0.0
    %96 = vmatpush1.msra.mxu0 %v78
    %97 = vmatprep.subr.mxu0 0.0
    %98 = vmatpush1.msra.mxu0 %v79
    %99 = vmatprep.subr.mxu0 0.0
    %100 = vmatpush1.msra.mxu0 0.0
    %101 = vmatprep.subr.mxu0 0.0
    %102 = vmatpush1.msra.mxu0 0.0
    %103 = vmatprep.subr.mxu0 0.0
    %104 = vmatpush1.msra.mxu0 0.0
    %105 = vmatprep.subr.mxu0 0.0
    %106 = vmatpush1.msra.mxu0 0.0
    %107 = vmatprep.subr.mxu0 0.0
    %108 = vmatpush1.msra.mxu0 0.0
    %109 = vmatprep.subr.mxu0 0.0
    %110 = vmatpush1.msra.mxu0 0.0
    %111 = vmatprep.subr.mxu0 0.0
    %112 = vmatpush1.msra.mxu0 0.0
    %113 = vmatprep.subr.mxu0 0.0
    %114 = vmatpush1.msra.mxu0 0.0
    %115 = vmatprep.subr.mxu0 0.0
    %116 = vmatpush1.msra.mxu0 0.0
    %117 = vmatprep.subr.mxu0 0.0
    %118 = vmatpush1.msra.mxu0 0.0
    %119 = vmatprep.subr.mxu0 0.0
    %120 = vmatpush1.msra.mxu0 0.0
    %121 = vmatprep.subr.mxu0 0.0
    %122 = vmatpush1.msra.mxu0 0.0
    %123 = vmatprep.subr.mxu0 0.0
    %124 = vmatpush1.msra.mxu0 0.0
    %125 = vmatprep.subr.mxu0 0.0
    %126 = vmatpush1.msra.mxu0 0.0
    %127 = vmatprep.subr.mxu0 0.0
    %128 = vmatpush1.msra.mxu0 0.0
    %129 = vmatprep.subr.mxu0 0.0
    %130 = vmatpush1.msra.mxu0 0.0
    %131 = vmatprep.subr.mxu0 0.0
    %132 = vmatpush1.msra.mxu0 0.0
    %133 = vmatprep.subr.mxu0 0.0
    %134 = vmatpush1.msra.mxu0 0.0
    %135 = vmatprep.subr.mxu0 0.0
    %136 = vmatpush1.msra.mxu0 0.0
    %137 = vmatprep.subr.mxu0 0.0
    %138 = vmatpush1.msra.mxu0 0.0
    %139 = vmatprep.subr.mxu0 0.0
    %140 = vmatpush1.msra.mxu0 0.0
    %141 = vmatprep.subr.mxu0 0.0
    %142 = vmatpush1.msra.mxu0 0.0
    %143 = vmatprep.subr.mxu0 0.0
    %144 = vmatpush1.msra.mxu0 0.0
    %145 = vmatprep.subr.mxu0 0.0
    %146 = vmatpush1.msra.mxu0 0.0
    %147 = vmatprep.subr.mxu0 0.0
    %148 = vmatpush1.msra.mxu0 0.0
    %149 = vmatprep.subr.mxu0 0.0
    %150 = vmatpush1.msra.mxu0 0.0
    %151 = vmatprep.subr.mxu0 0.0
    %152 = vmatpush1.msra.mxu0 0.0
    %153 = vmatprep.subr.mxu0 0.0
    %154 = vmatpush1.msra.mxu0 0.0
    %155 = vmatprep.mubr.f32.mxu0 0.0
    %156 = vmatmul.mubr.f32.gmra.mrb[0].mxu0 %v89
    %v157 = vpop.f32.mrb[0].mxu0
    %v158 = vadd.f32 %v85, %v157
    %v159 = vpop.f32.mrb[0].mxu0
    %160 = vdwg.mxu0
    %v161 = vtanh.pop %v158
    %v162 = vld [vmem:[#allocation5] sm:$0xff]
    %v163 = vadd.f32 %v161, %v162
    %v164 = vmul.f32 %v163, 0.5
    %v165 = vld [vmem:[#allocation8] sm:$0xff]
    %v166 = vld [vmem:[#allocation8 + $0x8] sm:$0xff]
    %v167 = vld [vmem:[#allocation8 + $0x10] sm:$0xff]
    %v168 = vld [vmem:[#allocation8 + $0x18] sm:$0xff]
    %v169 = vld [vmem:[#allocation8 + $0x20] sm:$0xff]
    %v170 = vld [vmem:[#allocation8 + $0x28] sm:$0xff]
    %v171 = vld [vmem:[#allocation8 + $0x30] sm:$0xff]
    %v172 = vld [vmem:[#allocation8 + $0x38] sm:$0xff]
    %v173 = vld [vmem:[%s5] sm:$0x1]
    %v175 = vlaneseq
    %v176 = vshrl.u32 %v175, 7
    %v177 = vsub.s32 0, %v176
    %v178 = vrot.slane %v173, %v177
    %vm180 = vcmask 523264
    %v182 = vsel %vm180, %v164, 0
    %184 = vmatprep.subr.mxu0 0.0
    %185 = vmatpush1.msra.mxu0 %v165
    %186 = vmatprep.subr.mxu0 0.0
    %187 = vmatpush1.msra.mxu0 %v166
    %188 = vmatprep.subr.mxu0 0.0
    %189 = vmatpush1.msra.mxu0 %v167
    %190 = vmatprep.subr.mxu0 0.0
    %191 = vmatpush1.msra.mxu0 %v168
    %192 = vmatprep.subr.mxu0 0.0
    %193 = vmatpush1.msra.mxu0 %v169
    %194 = vmatprep.subr.mxu0 0.0
    %195 = vmatpush1.msra.mxu0 %v170
    %196 = vmatprep.subr.mxu0 0.0
    %197 = vmatpush1.msra.mxu0 %v171
    %198 = vmatprep.subr.mxu0 0.0
    %199 = vmatpush1.msra.mxu0 %v172
    %200 = vmatprep.subr.mxu0 0.0
    %201 = vmatpush1.msra.mxu0 0.0
    %202 = vmatprep.subr.mxu0 0.0
    %203 = vmatpush1.msra.mxu0 0.0
    %204 = vmatprep.subr.mxu0 0.0
    %205 = vmatpush1.msra.mxu0 0.0
    %206 = vmatprep.subr.mxu0 0.0
    %207 = vmatpush1.msra.mxu0 0.0
    %208 = vmatprep.subr.mxu0 0.0
    %209 = vmatpush1.msra.mxu0 0.0
    %210 = vmatprep.subr.mxu0 0.0
    %211 = vmatpush1.msra.mxu0 0.0
    %212 = vmatprep.subr.mxu0 0.0
    %213 = vmatpush1.msra.mxu0 0.0
    %214 = vmatprep.subr.mxu0 0.0
    %215 = vmatpush1.msra.mxu0 0.0
    %216 = vmatprep.subr.mxu0 0.0
    %217 = vmatpush1.msra.mxu0 0.0
    %218 = vmatprep.subr.mxu0 0.0
    %219 = vmatpush1.msra.mxu0 0.0
    %220 = vmatprep.subr.mxu0 0.0
    %221 = vmatpush1.msra.mxu0 0.0
    %222 = vmatprep.subr.mxu0 0.0
    %223 = vmatpush1.msra.mxu0 0.0
    %224 = vmatprep.subr.mxu0 0.0
    %225 = vmatpush1.msra.mxu0 0.0
    %226 = vmatprep.subr.mxu0 0.0
    %227 = vmatpush1.msra.mxu0 0.0
    %228 = vmatprep.subr.mxu0 0.0
    %229 = vmatpush1.msra.mxu0 0.0
    %230 = vmatprep.subr.mxu0 0.0
    %231 = vmatpush1.msra.mxu0 0.0
    %232 = vmatprep.subr.mxu0 0.0
    %233 = vmatpush1.msra.mxu0 0.0
    %234 = vmatprep.subr.mxu0 0.0
    %235 = vmatpush1.msra.mxu0 0.0
    %236 = vmatprep.subr.mxu0 0.0
    %237 = vmatpush1.msra.mxu0 0.0
    %238 = vmatprep.subr.mxu0 0.0
    %239 = vmatpush1.msra.mxu0 0.0
    %240 = vmatprep.subr.mxu0 0.0
    %241 = vmatpush1.msra.mxu0 0.0
    %242 = vmatprep.subr.mxu0 0.0
    %243 = vmatpush1.msra.mxu0 0.0
    %244 = vmatprep.subr.mxu0 0.0
    %245 = vmatpush1.msra.mxu0 0.0
    %246 = vmatprep.subr.mxu0 0.0
    %247 = vmatpush1.msra.mxu0 0.0
    %248 = vmatprep.mubr.f32.mxu0 0.0
    %249 = vmatmul.mubr.f32.gmra.mrb[0].mxu0 %v182
    %v250 = vpop.f32.mrb[0].mxu0
    %v251 = vadd.f32 %v178, %v250
    %v252 = vpop.f32.mrb[0].mxu0
    %253 = vdwg.mxu0
    %v254 = vlaneseq
    %v255 = vand.u32 %v254, 127
    %vm256 = vcmp.ge.s32.totalorder %v255, 32
    %v257 = vmax.f32 %v251, 0.0
    %v258 = vand.u32 2147483647, %v251
    %v259 = vsub.f32 0.0, %v258
    %v260 = vmul.f32 %v259, 1.442695
    %v261 = vpow.pop %v260
    %v262 = vadd.f32 %v261, 1.0
    %v263 = vlog2.pop %v262
    %v264 = vmul.f32 %v263, 0.6931472
    %v265 = vmul.f32 -0.5, %v261
    %v266 = vadd.f32 %v265, 1.0
    %v267 = vmul.f32 %v266, %v261
    %v268 = vand.u32 2147483647, %v261
    %vm269 = vcmp.lt.f32.partialorder %v268, 0.0004427343
    %v270 = vsel %vm269, %v267, %v264
    %v271 = vadd.f32 %v257, %v270
    %v272 = vsel %vm256, %v271, %v251
    %273 = vst [vmem:[#allocation10] sm:$0xff] %v272
    // Predicated region
    $region42: #{tpu_custom_call.1} parent=1 // pred_check
      _
    $region43: #{tpu_custom_call.1} parent=1 // pred_check_branch
      %275 = sbr.rel (0) target = $region45
    $region44: #{tpu_custom_call.1} parent=1 // pred_region
      %s277 = ssub.s32 128, 128
      %278 = vsyncadd [#allocation4], %s277
      %s280 = sshll.u32 [#allocation10], 4
      %s281 = int_to_ptr.vmem [resolvable:$true] %s280
      %283 = dma.vmem_to_hbm [thread:$0]  %s281, 128, %s6, [#allocation4]
    $region45: #{tpu_custom_call.1} parent=1 // pred_fallthru
      _
    // Predicated region
    $region46: #{tpu_custom_call.1} parent=1 // pred_check
      _
    $region47: #{tpu_custom_call.1} parent=1 // pred_check_branch
      %285 = sbr.rel (0) target = $region49
    $region48: #{tpu_custom_call.1} parent=1 // pred_region
      %286 = dma.done [#allocation4], 128
    $region49: #{tpu_custom_call.1} parent=1 // pred_fallthru
      _
    %287 = vsyncpa [#allocation3], 1
    %288 = vsyncpa [#allocation6], 1
    %289 = vsyncpa [#allocation9], 1
    %290 = vsyncpa [#allocation4], 1

</llo_original>
